<compile_context>
chip_gen: v5e
topology: v5e:2x2
jax: 0.10.0
libtpu: 0.0.40
codegen_flags: <defaults>
</compile_context>

<pallas_src>
import jax
import jax.numpy as jnp
from jax import lax
from jax.experimental import pallas as pl
from jax.experimental.pallas import tpu as pltpu

IN_F = 2
HID_F = 5
OUT_F = 2

LANES = 128   # TPU lane width: 128 samples per lane-row
CHUNK = 8     # sublane rows per inner step -> one dense (8,128) f32 vreg per operand


def mm_cls_kernel(w1_ref, b1_ref, wd_ref, bd_ref, x_ref, o_ref):
    # x_ref / o_ref: (2, BR, 128) f32 VMEM slabs, batch mapped to (sublane, lane).
    # w1: (2,5), b1: (1,5), wd: (1,5) = w2[:,1]-w2[:,0], bd: (1,1) = b2[1]-b2[0],
    # all in SMEM.

    # Hoist every SMEM scalar read once (broadcast_in_dim is not CSE'd by JAX,
    # so reading these inside the chunk loop would re-broadcast every iteration).
    w1a = [w1_ref[0, j] for j in range(HID_F)]
    w1b = [w1_ref[1, j] for j in range(HID_F)]
    b1s = [b1_ref[0, j] for j in range(HID_F)]
    wds = [wd_ref[0, j] for j in range(HID_F)]
    bds = bd_ref[0, 0]

    n_chunks = x_ref.shape[1] // CHUNK

    def body(c, carry):
        r0 = pl.multiple_of(c * CHUNK, CHUNK)
        x0 = x_ref[0, pl.ds(r0, CHUNK), :]          # (8, 128) dense slab
        x1 = x_ref[1, pl.ds(r0, CHUNK), :]

        # Linear(2->5) -> square -> fused 5->1 "difference" head, unrolled (VPU only).
        acc = None
        for j in range(HID_F):
            hj = w1a[j] * x0 + w1b[j] * x1 + b1s[j]
            t = (hj * hj) * wds[j]
            acc = t if acc is None else acc + t
        d = acc + bds                               # d = z1 - z0

        # softmax([z0, z1]) == [1 - sigmoid(d), sigmoid(d)].
        # Numerically stable sigmoid; exact division so the two rows sum to 1.
        e = jnp.exp(-jnp.abs(d))                    # EUP
        q = e / (1.0 + e)
        p1 = jnp.where(d >= 0, 1.0 - q, q)

        o_ref[0, pl.ds(r0, CHUNK), :] = 1.0 - p1    # dense, unmasked stores
        o_ref[1, pl.ds(r0, CHUNK), :] = p1
        return carry

    lax.fori_loop(0, n_chunks, body, 0, unroll=(n_chunks <= 16))


def mm_cls_forward(x, w1, b1, w2, b2, *, block_rows=256):
    """x: (N, 2) f32; weights stored as [in, out] so y = x @ W + b. Returns (N, 2)."""
    n = x.shape[0]

    # Fold the 5->2 head into its softmax-equivalent difference form.
    wd = (w2[:, 1] - w2[:, 0]).reshape(1, HID_F)
    bd = (b2[:, 1] - b2[:, 0]).reshape(1, 1)

    # Batch -> (sublane, lane) slabs: pad N to a multiple of block_rows*128
    # (block_rows itself is a multiple of 8, sized to the actual N).
    r_needed = -(-n // LANES)
    br = max(CHUNK, min(block_rows, -(-r_needed // CHUNK) * CHUNK))
    n_block = br * LANES
    n_pad = -(-n // n_block) * n_block
    r_pad = n_pad // LANES

    xt = x.astype(jnp.float32).T                    # (2, N): batch on the fast axes
    if n_pad != n:
        xt = jnp.pad(xt, ((0, 0), (0, n_pad - n)))  # zero pad is benign for sigmoid
    xt = xt.reshape(IN_F, r_pad, LANES)             # free reshape -> sublane-dense

    smem = pl.BlockSpec(memory_space=pltpu.MemorySpace.SMEM)
    out = pl.pallas_call(
        mm_cls_kernel,
        out_shape=jax.ShapeDtypeStruct((OUT_F, r_pad, LANES), jnp.float32),
        grid=(r_pad // br,),
        in_specs=[
            smem, smem, smem, smem,                             # w1, b1, wd, bd
            pl.BlockSpec((IN_F, br, LANES), lambda i: (0, i, 0)),
        ],
        out_specs=pl.BlockSpec((OUT_F, br, LANES), lambda i: (0, i, 0)),
        compiler_params=pltpu.CompilerParams(
            dimension_semantics=("parallel",)),     # v7x: shard batch over both TCs
    )(w1, b1, wd, bd, xt)

    # TODO(synk): a fused consumer could accept the (2, R, 128) slab directly and
    # skip this transpose-back (the only remaining extra wrapper pass over the data).
    return out.reshape(OUT_F, n_pad)[:, :n].T


def init_params(key):
    # PyTorch Linear init: U(-1/sqrt(fan_in), 1/sqrt(fan_in)) for W and b.
    k1, k2, k3, k4 = jax.random.split(key, 4)
    bound1 = 1.0 / jnp.sqrt(2.0)
    bound2 = 1.0 / jnp.sqrt(5.0)
    # stored as [in, out] so the math is x @ W + b
    w1 = jax.random.uniform(k1, (IN_F, HID_F), jnp.float32, -bound1, bound1)
    b1 = jax.random.uniform(k2, (1, HID_F), jnp.float32, -bound1, bound1)
    w2 = jax.random.uniform(k3, (HID_F, OUT_F), jnp.float32, -bound2, bound2)
    b2 = jax.random.uniform(k4, (1, OUT_F), jnp.float32, -bound2, bound2)
    return w1, b1, w2, b2


if __name__ == "__main__":
    key = jax.random.PRNGKey(0)
    kx, kp = jax.random.split(key)

    n = 500
    # x = rand(n, 2) * 2 - 1  (uniform in [-1, 1))
    x = jax.random.uniform(kx, (n, IN_F), jnp.float32) * 2.0 - 1.0

    w1, b1, w2, b2 = init_params(kp)

    out = jax.block_until_ready(mm_cls_forward(x, w1, b1, w2, b2))

    # Reference check in plain JAX.
    h_ref = (x @ w1 + b1) ** 2
    z_ref = h_ref @ w2 + b2
    ref = jax.nn.softmax(z_ref, axis=1)

    assert out.shape == (n, OUT_F)
    assert jnp.allclose(out, ref, atol=1e-4), "mismatch vs JAX reference"
    assert jnp.allclose(jnp.sum(out, axis=1), 1.0, atol=1e-5)

    print("KERNEL_OK")
</pallas_src>

<mosaic_0001>
module attributes {stable_mosaic.version = 11 : i64} {
  func.func @mm_cls_kernel(%arg0: i32, %arg1: memref<2x5xf32, #tpu.memory_space<smem>>, %arg2: memref<1x5xf32, #tpu.memory_space<smem>>, %arg3: memref<1x5xf32, #tpu.memory_space<smem>>, %arg4: memref<1x1xf32, #tpu.memory_space<smem>>, %arg5: memref<2x8x128xf32, #tpu.memory_space<vmem>>, %arg6: memref<2x8x128xf32, #tpu.memory_space<vmem>>) attributes {dimension_semantics = [#tpu.dimension_semantics<parallel>], iteration_bounds = array<i64: 1>, scalar_prefetch = 0 : i64, scratch_operands = 0 : i64, tpu.core_type = #tpu.core_type<tc>, window_params = [{transform_indices = @transform_0, window_bounds = array<i64: 2, 5>}, {transform_indices = @transform_1, window_bounds = array<i64: 1, 5>}, {transform_indices = @transform_2, window_bounds = array<i64: 1, 5>}, {transform_indices = @transform_3, window_bounds = array<i64: 1, 1>}, {transform_indices = @transform_4, window_bounds = array<i64: 2, 8, 128>}, {transform_indices = @transform_5, window_bounds = array<i64: 2, 8, 128>}]} {
    %c0 = arith.constant 0 : index
    %c0_0 = arith.constant 0 : index
    %0 = memref.load %arg1[%c0, %c0_0] : memref<2x5xf32, #tpu.memory_space<smem>>
    %c0_1 = arith.constant 0 : index
    %c1 = arith.constant 1 : index
    %1 = memref.load %arg1[%c0_1, %c1] : memref<2x5xf32, #tpu.memory_space<smem>>
    %c0_2 = arith.constant 0 : index
    %c2 = arith.constant 2 : index
    %2 = memref.load %arg1[%c0_2, %c2] : memref<2x5xf32, #tpu.memory_space<smem>>
    %c0_3 = arith.constant 0 : index
    %c3 = arith.constant 3 : index
    %3 = memref.load %arg1[%c0_3, %c3] : memref<2x5xf32, #tpu.memory_space<smem>>
    %c0_4 = arith.constant 0 : index
    %c4 = arith.constant 4 : index
    %4 = memref.load %arg1[%c0_4, %c4] : memref<2x5xf32, #tpu.memory_space<smem>>
    %c1_5 = arith.constant 1 : index
    %c0_6 = arith.constant 0 : index
    %5 = memref.load %arg1[%c1_5, %c0_6] : memref<2x5xf32, #tpu.memory_space<smem>>
    %c1_7 = arith.constant 1 : index
    %c1_8 = arith.constant 1 : index
    %6 = memref.load %arg1[%c1_7, %c1_8] : memref<2x5xf32, #tpu.memory_space<smem>>
    %c1_9 = arith.constant 1 : index
    %c2_10 = arith.constant 2 : index
    %7 = memref.load %arg1[%c1_9, %c2_10] : memref<2x5xf32, #tpu.memory_space<smem>>
    %c1_11 = arith.constant 1 : index
    %c3_12 = arith.constant 3 : index
    %8 = memref.load %arg1[%c1_11, %c3_12] : memref<2x5xf32, #tpu.memory_space<smem>>
    %c1_13 = arith.constant 1 : index
    %c4_14 = arith.constant 4 : index
    %9 = memref.load %arg1[%c1_13, %c4_14] : memref<2x5xf32, #tpu.memory_space<smem>>
    %c0_15 = arith.constant 0 : index
    %c0_16 = arith.constant 0 : index
    %10 = memref.load %arg2[%c0_15, %c0_16] : memref<1x5xf32, #tpu.memory_space<smem>>
    %c0_17 = arith.constant 0 : index
    %c1_18 = arith.constant 1 : index
    %11 = memref.load %arg2[%c0_17, %c1_18] : memref<1x5xf32, #tpu.memory_space<smem>>
    %c0_19 = arith.constant 0 : index
    %c2_20 = arith.constant 2 : index
    %12 = memref.load %arg2[%c0_19, %c2_20] : memref<1x5xf32, #tpu.memory_space<smem>>
    %c0_21 = arith.constant 0 : index
    %c3_22 = arith.constant 3 : index
    %13 = memref.load %arg2[%c0_21, %c3_22] : memref<1x5xf32, #tpu.memory_space<smem>>
    %c0_23 = arith.constant 0 : index
    %c4_24 = arith.constant 4 : index
    %14 = memref.load %arg2[%c0_23, %c4_24] : memref<1x5xf32, #tpu.memory_space<smem>>
    %c0_25 = arith.constant 0 : index
    %c0_26 = arith.constant 0 : index
    %15 = memref.load %arg3[%c0_25, %c0_26] : memref<1x5xf32, #tpu.memory_space<smem>>
    %c0_27 = arith.constant 0 : index
    %c1_28 = arith.constant 1 : index
    %16 = memref.load %arg3[%c0_27, %c1_28] : memref<1x5xf32, #tpu.memory_space<smem>>
    %c0_29 = arith.constant 0 : index
    %c2_30 = arith.constant 2 : index
    %17 = memref.load %arg3[%c0_29, %c2_30] : memref<1x5xf32, #tpu.memory_space<smem>>
    %c0_31 = arith.constant 0 : index
    %c3_32 = arith.constant 3 : index
    %18 = memref.load %arg3[%c0_31, %c3_32] : memref<1x5xf32, #tpu.memory_space<smem>>
    %c0_33 = arith.constant 0 : index
    %c4_34 = arith.constant 4 : index
    %19 = memref.load %arg3[%c0_33, %c4_34] : memref<1x5xf32, #tpu.memory_space<smem>>
    %c0_35 = arith.constant 0 : index
    %c0_36 = arith.constant 0 : index
    %20 = memref.load %arg4[%c0_35, %c0_36] : memref<1x1xf32, #tpu.memory_space<smem>>
    %c0_i32 = arith.constant 0 : i32
    %c8_i32 = arith.constant 8 : i32
    %21 = arith.muli %c0_i32, %c8_i32 : i32
    %22 = tpu.assume_multiple %21, 8 : i32
    %c0_37 = arith.constant 0 : index
    %23 = arith.index_cast %22 : i32 to index
    %c0_38 = arith.constant 0 : index
    %24 = vector.load %arg5[%c0_37, %23, %c0_38] : memref<2x8x128xf32, #tpu.memory_space<vmem>>, vector<1x8x128xf32>
    %25 = vector.shape_cast %24 : vector<1x8x128xf32> to vector<8x128xf32>
    %c1_39 = arith.constant 1 : index
    %26 = arith.index_cast %22 : i32 to index
    %c0_40 = arith.constant 0 : index
    %27 = vector.load %arg5[%c1_39, %26, %c0_40] : memref<2x8x128xf32, #tpu.memory_space<vmem>>, vector<1x8x128xf32>
    %28 = vector.shape_cast %27 : vector<1x8x128xf32> to vector<8x128xf32>
    %29 = vector.broadcast %0 : f32 to vector<8x128xf32>
    %30 = arith.mulf %29, %25 : vector<8x128xf32>
    %31 = vector.broadcast %5 : f32 to vector<8x128xf32>
    %32 = arith.mulf %31, %28 : vector<8x128xf32>
    %33 = arith.addf %30, %32 : vector<8x128xf32>
    %34 = vector.broadcast %10 : f32 to vector<8x128xf32>
    %35 = arith.addf %33, %34 : vector<8x128xf32>
    %36 = arith.mulf %35, %35 : vector<8x128xf32>
    %37 = vector.broadcast %15 : f32 to vector<8x128xf32>
    %38 = arith.mulf %36, %37 : vector<8x128xf32>
    %39 = vector.broadcast %1 : f32 to vector<8x128xf32>
    %40 = arith.mulf %39, %25 : vector<8x128xf32>
    %41 = vector.broadcast %6 : f32 to vector<8x128xf32>
    %42 = arith.mulf %41, %28 : vector<8x128xf32>
    %43 = arith.addf %40, %42 : vector<8x128xf32>
    %44 = vector.broadcast %11 : f32 to vector<8x128xf32>
    %45 = arith.addf %43, %44 : vector<8x128xf32>
    %46 = arith.mulf %45, %45 : vector<8x128xf32>
    %47 = vector.broadcast %16 : f32 to vector<8x128xf32>
    %48 = arith.mulf %46, %47 : vector<8x128xf32>
    %49 = arith.addf %38, %48 : vector<8x128xf32>
    %50 = vector.broadcast %2 : f32 to vector<8x128xf32>
    %51 = arith.mulf %50, %25 : vector<8x128xf32>
    %52 = vector.broadcast %7 : f32 to vector<8x128xf32>
    %53 = arith.mulf %52, %28 : vector<8x128xf32>
    %54 = arith.addf %51, %53 : vector<8x128xf32>
    %55 = vector.broadcast %12 : f32 to vector<8x128xf32>
    %56 = arith.addf %54, %55 : vector<8x128xf32>
    %57 = arith.mulf %56, %56 : vector<8x128xf32>
    %58 = vector.broadcast %17 : f32 to vector<8x128xf32>
    %59 = arith.mulf %57, %58 : vector<8x128xf32>
    %60 = arith.addf %49, %59 : vector<8x128xf32>
    %61 = vector.broadcast %3 : f32 to vector<8x128xf32>
    %62 = arith.mulf %61, %25 : vector<8x128xf32>
    %63 = vector.broadcast %8 : f32 to vector<8x128xf32>
    %64 = arith.mulf %63, %28 : vector<8x128xf32>
    %65 = arith.addf %62, %64 : vector<8x128xf32>
    %66 = vector.broadcast %13 : f32 to vector<8x128xf32>
    %67 = arith.addf %65, %66 : vector<8x128xf32>
    %68 = arith.mulf %67, %67 : vector<8x128xf32>
    %69 = vector.broadcast %18 : f32 to vector<8x128xf32>
    %70 = arith.mulf %68, %69 : vector<8x128xf32>
    %71 = arith.addf %60, %70 : vector<8x128xf32>
    %72 = vector.broadcast %4 : f32 to vector<8x128xf32>
    %73 = arith.mulf %72, %25 : vector<8x128xf32>
    %74 = vector.broadcast %9 : f32 to vector<8x128xf32>
    %75 = arith.mulf %74, %28 : vector<8x128xf32>
    %76 = arith.addf %73, %75 : vector<8x128xf32>
    %77 = vector.broadcast %14 : f32 to vector<8x128xf32>
    %78 = arith.addf %76, %77 : vector<8x128xf32>
    %79 = arith.mulf %78, %78 : vector<8x128xf32>
    %80 = vector.broadcast %19 : f32 to vector<8x128xf32>
    %81 = arith.mulf %79, %80 : vector<8x128xf32>
    %82 = arith.addf %71, %81 : vector<8x128xf32>
    %83 = vector.broadcast %20 : f32 to vector<8x128xf32>
    %84 = arith.addf %82, %83 : vector<8x128xf32>
    %85 = math.absf %84 : vector<8x128xf32>
    %cst = arith.constant 0.000000e+00 : f32
    %86 = vector.broadcast %cst : f32 to vector<8x128xf32>
    %87 = arith.subf %86, %85 : vector<8x128xf32>
    %88 = math.exp %87 : vector<8x128xf32>
    %cst_41 = arith.constant 1.000000e+00 : f32
    %89 = vector.broadcast %cst_41 : f32 to vector<8x128xf32>
    %90 = arith.addf %89, %88 : vector<8x128xf32>
    %91 = arith.divf %88, %90 : vector<8x128xf32>
    %cst_42 = arith.constant 0.000000e+00 : f32
    %92 = vector.broadcast %cst_42 : f32 to vector<8x128xf32>
    %93 = arith.cmpf oge, %84, %92 : vector<8x128xf32>
    %cst_43 = arith.constant 1.000000e+00 : f32
    %94 = vector.broadcast %cst_43 : f32 to vector<8x128xf32>
    %95 = arith.subf %94, %91 : vector<8x128xf32>
    %96 = arith.select %93, %95, %91 : vector<8x128xi1>, vector<8x128xf32>
    %cst_44 = arith.constant 1.000000e+00 : f32
    %97 = vector.broadcast %cst_44 : f32 to vector<8x128xf32>
    %98 = arith.subf %97, %96 : vector<8x128xf32>
    %c0_45 = arith.constant 0 : index
    %99 = arith.index_cast %22 : i32 to index
    %c0_46 = arith.constant 0 : index
    %100 = vector.load %arg6[%c0_45, %99, %c0_46] : memref<2x8x128xf32, #tpu.memory_space<vmem>>, vector<1x8x128xf32>
    %101 = vector.shape_cast %100 : vector<1x8x128xf32> to vector<8x128xf32>
    %102 = vector.shape_cast %98 : vector<8x128xf32> to vector<1x8x128xf32>
    tpu.vector_store %arg6[%c0_45, %99, %c0_46], %102 {strides = array<i32>} : memref<2x8x128xf32, #tpu.memory_space<vmem>>, vector<1x8x128xf32>,
    %c1_47 = arith.constant 1 : index
    %103 = arith.index_cast %22 : i32 to index
    %c0_48 = arith.constant 0 : index
    %104 = vector.load %arg6[%c1_47, %103, %c0_48] : memref<2x8x128xf32, #tpu.memory_space<vmem>>, vector<1x8x128xf32>
    %105 = vector.shape_cast %104 : vector<1x8x128xf32> to vector<8x128xf32>
    %106 = vector.shape_cast %96 : vector<8x128xf32> to vector<1x8x128xf32>
    tpu.vector_store %arg6[%c1_47, %103, %c0_48], %106 {strides = array<i32>} : memref<2x8x128xf32, #tpu.memory_space<vmem>>, vector<1x8x128xf32>,
    %c1_i32 = arith.constant 1 : i32
    return
  }
  func.func @transform_0(%arg0: i32) -> (i32, i32) {
    %c0_i32 = arith.constant 0 : i32
    %c0_i32_0 = arith.constant 0 : i32
    %c0_i32_1 = arith.constant 0 : i32
    return %c0_i32, %c0_i32_0 : i32, i32
  }
  func.func @transform_1(%arg0: i32) -> (i32, i32) {
    %c0_i32 = arith.constant 0 : i32
    %c0_i32_0 = arith.constant 0 : i32
    %c0_i32_1 = arith.constant 0 : i32
    return %c0_i32, %c0_i32_0 : i32, i32
  }
  func.func @transform_2(%arg0: i32) -> (i32, i32) {
    %c0_i32 = arith.constant 0 : i32
    %c0_i32_0 = arith.constant 0 : i32
    %c0_i32_1 = arith.constant 0 : i32
    return %c0_i32, %c0_i32_0 : i32, i32
  }
  func.func @transform_3(%arg0: i32) -> (i32, i32) {
    %c0_i32 = arith.constant 0 : i32
    %c0_i32_0 = arith.constant 0 : i32
    %c0_i32_1 = arith.constant 0 : i32
    return %c0_i32, %c0_i32_0 : i32, i32
  }
  func.func @transform_4(%arg0: i32) -> (i32, i32, i32) {
    %c0_i32 = arith.constant 0 : i32
    %c0_i32_0 = arith.constant 0 : i32
    %c0_i32_1 = arith.constant 0 : i32
    return %c0_i32, %arg0, %c0_i32_0 : i32, i32, i32
  }
  func.func @transform_5(%arg0: i32) -> (i32, i32, i32) {
    %c0_i32 = arith.constant 0 : i32
    %c0_i32_0 = arith.constant 0 : i32
    %c0_i32_1 = arith.constant 0 : i32
    return %c0_i32, %arg0, %c0_i32_0 : i32, i32, i32
  }
}

</mosaic_0001>

<llo_original>
// kernel: tpu_custom_call.1
$region0: #{tpu_custom_call.1}
  #allocation0 [shape = 'u32[]', space=smem, size = 0x4, offset = 0x4, fixed_abs, tag = 'smem constant byte address 0x4 - core index']
  #allocation1 [shape = 'u32[72,128]{1,0:T(1,128)}', space=vmem, size = 0x9000, scoped, tag = 'internal scratch']
  #allocation2 [shape = 'f32[1,1]{1,0:T(1,128)S(6)}', space=smem, size = 0x200, scoped, tag = 'scoped memory for tpu_custom_call.1']
  %s0 = inlined_call_operand.vmem [shape: f32[2,5], index: 0, kind: input, shape index: {}]
  %s1 = inlined_call_operand.hbm [shape: f32[1,5], index: 1, kind: input, shape index: {}]
  %s2 = inlined_call_operand.vmem [shape: f32[1,5], index: 2, kind: input, shape index: {}]
  %s3 = inlined_call_operand.<no memory space> [shape: f32[1,1], index: 3, kind: input, shape index: {}]
  %s4 = inlined_call_operand.hbm [shape: f32[2,8,128], index: 4, kind: input, shape index: {}]
  %s5 = inlined_call_operand.hbm [shape: f32[2,8,128], index: 5, kind: output, shape index: {}]
  %s6 = sld [smem:[#allocation0]]
  $region46: #{tpu_custom_call.1} parent=0
    _
  %s8 = ssub.s32 1, %s6
  %s9 = scalar_select 0, %s8, %s6
  %10 = sst [smem:[#allocation2]] %s3
  $region1: #{tpu_custom_call.1} parent=0
    #allocation3 [shape = 'u8[1024]{0}', space=smem, size = 0x400, scoped, tag = 'input window, operand 0, single buffered']
    #allocation4 [shape = 's32[1]{0}', space=sflag, size = 0x4, scoped, tag = 'scoped memory for tpu_custom_call.1']
    #allocation5 [shape = 's32[1]{0}', space=sflag, size = 0x4, scoped, tag = 'scoped memory for tpu_custom_call.1']
    #allocation6 [shape = 's32[1]{0}', space=sflag, size = 0x4, scoped, tag = 'scoped memory for tpu_custom_call.1']
    #allocation7 [shape = 's32[1]{0}', space=sflag, size = 0x4, scoped, tag = 'scoped memory for tpu_custom_call.1']
    #allocation8 [shape = 'u8[512]{0}', space=smem, size = 0x200, scoped, tag = 'input window, operand 1, single buffered']
    #allocation9 [shape = 'u8[512]{0}', space=smem, size = 0x200, scoped, tag = 'input window, operand 2, single buffered']
    #allocation10 [shape = 's32[1]{0}', space=sflag, size = 0x4, scoped, tag = 'scoped memory for tpu_custom_call.1']
    #allocation11 [shape = 'u8[8192]{0}', space=vmem, size = 0x2000, scoped, tag = 'input window, operand 4, single buffered']
    #allocation12 [shape = 'u8[8192]{0}', space=vmem, size = 0x2000, scoped, tag = 'output window, operand 0, single buffered']
    %11 = vsyncpa [#allocation7], 0
    %12 = vsyncpa [#allocation6], 0
    %13 = vsyncpa [#allocation10], 0
    %14 = vsyncpa [#allocation4], 0
    %15 = vsyncpa [#allocation5], 0
    // Predicated region
    $region2: #{tpu_custom_call.1} parent=1 // pred_check
      _
    $region3: #{tpu_custom_call.1} parent=1 // pred_check_branch
      %17 = sbr.rel (0) target = $region5
    $region4: #{tpu_custom_call.1} parent=1 // pred_region
      %19 = vsyncadd [#allocation7], 0
      %s21 = sshll.u32 %s0, 4
      %s22 = int_to_ptr.vmem [resolvable:$true] %s21
      %24 = dma.vmem_to_smem %s22, 32, [#allocation3], [#allocation7]
    $region5: #{tpu_custom_call.1} parent=1 // pred_fallthru
      _
    // Predicated region
    $region6: #{tpu_custom_call.1} parent=1 // pred_check
      _
    $region7: #{tpu_custom_call.1} parent=1 // pred_check_branch
      %26 = sbr.rel (0) target = $region9
    $region8: #{tpu_custom_call.1} parent=1 // pred_region
      %28 = vsyncadd [#allocation6], 0
      %s30 = sshll.u32 %s1, 4
      %s31 = int_to_ptr.hbm [resolvable:$true] %s30
      %33 = dma.hbm_to_smem %s31, 16, [#allocation8], [#allocation6]
    $region9: #{tpu_custom_call.1} parent=1 // pred_fallthru
      _
    // Predicated region
    $region10: #{tpu_custom_call.1} parent=1 // pred_check
      _
    $region11: #{tpu_custom_call.1} parent=1 // pred_check_branch
      %35 = sbr.rel (0) target = $region13
    $region12: #{tpu_custom_call.1} parent=1 // pred_region
      %37 = vsyncadd [#allocation10], 0
      %s39 = sshll.u32 %s2, 4
      %s40 = int_to_ptr.vmem [resolvable:$true] %s39
      %42 = dma.vmem_to_smem %s40, 16, [#allocation9], [#allocation10]
    $region13: #{tpu_custom_call.1} parent=1 // pred_fallthru
      _
    // Predicated region
    $region14: #{tpu_custom_call.1} parent=1 // pred_check
      _
    $region15: #{tpu_custom_call.1} parent=1 // pred_check_branch
      %44 = sbr.rel (0) target = $region17
    $region16: #{tpu_custom_call.1} parent=1 // pred_region
      _
    $region17: #{tpu_custom_call.1} parent=1 // pred_fallthru
      _
    // Predicated region
    $region18: #{tpu_custom_call.1} parent=1 // pred_check
      _
    $region19: #{tpu_custom_call.1} parent=1 // pred_check_branch
      %46 = sbr.rel (0) target = $region21
    $region20: #{tpu_custom_call.1} parent=1 // pred_region
      %48 = vsyncadd [#allocation4], 0
      %s49 = sshll.u32 %s4, 4
      %s50 = int_to_ptr.hbm [resolvable:$true] %s49
      %s51 = sshll.u32 [#allocation11], 4
      %s52 = int_to_ptr.vmem [resolvable:$true] %s51
      %57 = dma.hbm_to_vmem [thread:$0]  %s50, 256, %s52, [#allocation4], 128, 128, 8
    $region21: #{tpu_custom_call.1} parent=1 // pred_fallthru
      _
    // Predicated region
    $region22: #{tpu_custom_call.1} parent=1 // pred_check
      _
    $region23: #{tpu_custom_call.1} parent=1 // pred_check_branch
      %59 = sbr.rel (0) target = $region25
    $region24: #{tpu_custom_call.1} parent=1 // pred_region
      %61 = dma.done [#allocation7], 32
    $region25: #{tpu_custom_call.1} parent=1 // pred_fallthru
      _
    // Predicated region
    $region26: #{tpu_custom_call.1} parent=1 // pred_check
      _
    $region27: #{tpu_custom_call.1} parent=1 // pred_check_branch
      %63 = sbr.rel (0) target = $region29
    $region28: #{tpu_custom_call.1} parent=1 // pred_region
      %65 = dma.done [#allocation6], 16
    $region29: #{tpu_custom_call.1} parent=1 // pred_fallthru
      _
    // Predicated region
    $region30: #{tpu_custom_call.1} parent=1 // pred_check
      _
    $region31: #{tpu_custom_call.1} parent=1 // pred_check_branch
      %67 = sbr.rel (0) target = $region33
    $region32: #{tpu_custom_call.1} parent=1 // pred_region
      %69 = dma.done [#allocation10], 16
    $region33: #{tpu_custom_call.1} parent=1 // pred_fallthru
      _
    // Predicated region
    $region34: #{tpu_custom_call.1} parent=1 // pred_check
      _
    $region35: #{tpu_custom_call.1} parent=1 // pred_check_branch
      %71 = sbr.rel (0) target = $region37
    $region36: #{tpu_custom_call.1} parent=1 // pred_region
      %73 = dma.done [#allocation4], 256
    $region37: #{tpu_custom_call.1} parent=1 // pred_fallthru
      _
    %74 = sfence
    %s75 = sld [smem:[#allocation3]]
    %s76 = sld [smem:[#allocation3 + $0x1]]
    %s77 = sld [smem:[#allocation3 + $0x2]]
    %s78 = sld [smem:[#allocation3 + $0x3]]
    %s79 = sld [smem:[#allocation3 + $0x4]]
    %s80 = sld [smem:[#allocation3 + $0x80]]
    %s81 = sld [smem:[#allocation3 + $0x81]]
    %s82 = sld [smem:[#allocation3 + $0x82]]
    %s83 = sld [smem:[#allocation3 + $0x83]]
    %s84 = sld [smem:[#allocation3 + $0x84]]
    %s85 = sld [smem:[#allocation8]]
    %s86 = sld [smem:[#allocation8 + $0x1]]
    %s87 = sld [smem:[#allocation8 + $0x2]]
    %s88 = sld [smem:[#allocation8 + $0x3]]
    %s89 = sld [smem:[#allocation8 + $0x4]]
    %s90 = sld [smem:[#allocation9]]
    %s91 = sld [smem:[#allocation9 + $0x1]]
    %s92 = sld [smem:[#allocation9 + $0x2]]
    %s93 = sld [smem:[#allocation9 + $0x3]]
    %s94 = sld [smem:[#allocation9 + $0x4]]
    %s95 = sld [smem:[#allocation2]]
    %v96 = vld [vmem:[#allocation11] sm:$0xff]
    %s97 = sadd.s32 0, 8
    %s98 = scalar_lea.vmem [#allocation11], %s97
    %v99 = vld [vmem:[%s98] sm:$0xff]
    %v100 = vstv %s75
    %v101 = vmul.f32 %v100, %v96
    %v102 = vstv %s80
    %v103 = vmul.f32 %v102, %v99
    %v104 = vadd.f32 %v101, %v103
    %v105 = vstv %s85
    %v106 = vadd.f32 %v104, %v105
    %v107 = vmul.f32 %v106, %v106
    %v108 = vstv %s90
    %v109 = vmul.f32 %v107, %v108
    %v110 = vstv %s76
    %v111 = vmul.f32 %v110, %v96
    %v112 = vstv %s81
    %v113 = vmul.f32 %v112, %v99
    %v114 = vadd.f32 %v111, %v113
    %v115 = vstv %s86
    %v116 = vadd.f32 %v114, %v115
    %v117 = vmul.f32 %v116, %v116
    %v118 = vstv %s91
    %v119 = vmul.f32 %v117, %v118
    %v120 = vadd.f32 %v109, %v119
    %v121 = vstv %s77
    %v122 = vmul.f32 %v121, %v96
    %v123 = vstv %s82
    %v124 = vmul.f32 %v123, %v99
    %v125 = vadd.f32 %v122, %v124
    %v126 = vstv %s87
    %v127 = vadd.f32 %v125, %v126
    %v128 = vmul.f32 %v127, %v127
    %v129 = vstv %s92
    %v130 = vmul.f32 %v128, %v129
    %v131 = vadd.f32 %v120, %v130
    %v132 = vstv %s78
    %v133 = vmul.f32 %v132, %v96
    %v134 = vstv %s83
    %v135 = vmul.f32 %v134, %v99
    %v136 = vadd.f32 %v133, %v135
    %v137 = vstv %s88
    %v138 = vadd.f32 %v136, %v137
    %v139 = vmul.f32 %v138, %v138
    %v140 = vstv %s93
    %v141 = vmul.f32 %v139, %v140
    %v142 = vadd.f32 %v131, %v141
    %v143 = vstv %s79
    %v144 = vmul.f32 %v143, %v96
    %v145 = vstv %s84
    %v146 = vmul.f32 %v145, %v99
    %v147 = vadd.f32 %v144, %v146
    %v148 = vstv %s89
    %v149 = vadd.f32 %v147, %v148
    %v150 = vmul.f32 %v149, %v149
    %v151 = vstv %s94
    %v152 = vmul.f32 %v150, %v151
    %v153 = vadd.f32 %v142, %v152
    %v154 = vstv %s95
    %v155 = vadd.f32 %v153, %v154
    %v156 = vand.u32 2147483647, %v155
    %v157 = vsub.f32 0.0, %v156
    %v158 = vmul.f32 %v157, 1.442695
    %v159 = vpow.pop %v158
    %v160 = vadd.f32 %v159, 1.0
    %v161 = vrcp.pop %v160
    %v162 = vmul.f32 %v160, %v161
    %v163 = vsub.f32 1.0, %v162
    %v164 = vmul.f32 %v161, %v163
    %v165 = vadd.f32 %v161, %v164
    %vm166 = vweird.f32 %v160
    %vm167 = vweird.f32 %v161
    %vm168 = vmor %vm166, %vm167
    %v169 = vsel %vm168, %v161, %v165
    %v170 = vand.u32 2147483647, %v160
    %vm171 = vcmp.eq.f32.partialorder %v170, 8.507059e+37
    %v172 = vand.u32 %v160, 2147483648
    %v173 = vor.u32 1.1754944e-38, %v172
    %v174 = vsel %vm171, %v173, %v169
    %v175 = vmul.f32 %v159, %v174
    %vm176 = vcmp.ge.f32.partialorder %v155, 0.0
    %v177 = vsub.f32 1.0, %v175
    %v178 = vsel %vm176, %v177, %v175
    %v179 = vsub.f32 1.0, %v178
    %180 = vst [vmem:[#allocation12] sm:$0xff] %v179
    %s181 = scalar_lea.vmem [#allocation12], %s97
    %182 = vst [vmem:[%s181] sm:$0xff] %v178
    // Predicated region
    $region38: #{tpu_custom_call.1} parent=1 // pred_check
      _
    $region39: #{tpu_custom_call.1} parent=1 // pred_check_branch
      %184 = sbr.rel (0) target = $region41
    $region40: #{tpu_custom_call.1} parent=1 // pred_region
      %186 = vsyncadd [#allocation5], 0
      %s187 = sshll.u32 [#allocation12], 4
      %s188 = int_to_ptr.vmem [resolvable:$true] %s187
      %s189 = sshll.u32 %s5, 4
      %s190 = int_to_ptr.hbm [resolvable:$true] %s189
      %195 = dma.vmem_to_hbm [thread:$0]  %s188, 256, %s190, [#allocation5], 128, 128, 8
    $region41: #{tpu_custom_call.1} parent=1 // pred_fallthru
      _
    // Predicated region
    $region42: #{tpu_custom_call.1} parent=1 // pred_check
      _
    $region43: #{tpu_custom_call.1} parent=1 // pred_check_branch
      %197 = sbr.rel (0) target = $region45
    $region44: #{tpu_custom_call.1} parent=1 // pred_region
      %199 = dma.done [#allocation5], 256
    $region45: #{tpu_custom_call.1} parent=1 // pred_fallthru
      _
    %200 = vsyncpa [#allocation4], 1
    %201 = vsyncpa [#allocation5], 1
    %202 = vsyncpa [#allocation6], 1
    %203 = vsyncpa [#allocation7], 1
    %204 = vsyncpa [#allocation10], 1

</llo_original>
